<compile_context>
chip_gen: v7x
topology: tpu7x:2x2x1
jax: 0.10.0
libtpu: 0.0.40
codegen_flags: <defaults>
</compile_context>

<pallas_src>
import functools

import jax
import jax.numpy as jnp
from jax.experimental import pallas as pl
from jax.experimental.pallas import tpu as pltpu

LANE = 128
HW_TILE_CAP = 8192                      # lanes per HW tile (pipeline depth > giant tiles)
MAX_ROW_TILE = 256
INPUT_VMEM_BUDGET = 12 * 1024 * 1024    # double-buffered input tiles; fits v7x's 64 MiB


def _round_up(a, b):
    return -(-a // b) * b


def _cdiv(a, b):
    return -(-a // b)


def _min_sublane(arr):
    # Minimum second-minor block size per dtype packing (f32:8, bf16:16, int8:32).
    return {4: 8, 2: 16, 1: 32}.get(arr.dtype.itemsize, 8)


def _soft_dice_kernel(x_ref, y_ref, *out_refs, hw, hw_tile, hw_blocks_per_split, square):
    """Grid: (splits, row_blocks, hw_blocks_per_split); axis 2 is the reduction axis."""
    s = pl.program_id(0)
    j = pl.program_id(2)

    @pl.when(j == 0)
    def _init():
        for o in out_refs:
            o[...] = jnp.zeros_like(o)

    x = x_ref[...].astype(jnp.float32)          # (row_tile, hw_tile)
    y = y_ref[...].astype(jnp.float32)          # (row_tile, hw_tile)

    def _accumulate(xv, yv):
        xy = xv * yv
        if square:
            tp = xy
            fp = xv - xy                        # == x * (1 - y)
            fn = yv - xy                        # == (1 - x) * y
            out_refs[0][...] += jnp.sum(tp * tp, axis=-1, keepdims=True)
            out_refs[1][...] += jnp.sum(fp * fp, axis=-1, keepdims=True)
            out_refs[2][...] += jnp.sum(fn * fn, axis=-1, keepdims=True)
        else:
            # square=False identity: 2*tp + fp + fn == sum(x) + sum(y).
            out_refs[0][...] += jnp.sum(xy, axis=-1, keepdims=True)
            out_refs[1][...] += jnp.sum(xv + yv, axis=-1, keepdims=True)

    # Global (un-clamped) column offset of this block; fully-OOB blocks mask to zero.
    start = (s * hw_blocks_per_split + j) * hw_tile
    is_interior = start + hw_tile <= hw

    @pl.when(is_interior)
    def _full():
        _accumulate(x, y)

    @pl.when(jnp.logical_not(is_interior))
    def _tail():
        col = jax.lax.broadcasted_iota(jnp.int32, x.shape, 1) + start
        m = (col < hw).astype(jnp.float32)
        _accumulate(x * m, y * m)


def soft_dice_loss(x, y, *, smooth=1.0, square=False, batch_dice=False, do_bg=True):
    """SoftDiceLoss.forward.  x: (B, C, *spatial).  y: same-shape one-hot (any dtype;
    int8 is cheapest to stream) or a label map of shape (B, *spatial) / (B, 1, *spatial).

    Note: streaming a float one-hot keeps full precision; hard labels are best passed
    as int8 / as a label map.
    """
    # TODO(synk): apply_nonlin (e.g. softmax over channels) and loss_mask are not
    # implemented in the kernel.
    B, C = x.shape[:2]
    if y.shape == x.shape:
        y_onehot = y
    else:
        labels = y
        if labels.ndim == x.ndim:               # (B, 1, *spatial) label map
            labels = labels.reshape((labels.shape[0],) + labels.shape[2:])
        # TODO(synk): stream the raw label map and build the one-hot in-kernel to avoid
        # this (B, C, *spatial) int8 materialisation entirely.
        y_onehot = jax.nn.one_hot(labels.astype(jnp.int32), C, axis=1, dtype=jnp.int8)

    n_rows = B * C
    hw = 1
    for d in x.shape[2:]:
        hw *= d

    # Pure metadata reshapes on contiguous arrays: no HBM copies, no padding.
    x2 = x.reshape(n_rows, hw)
    y2 = y_onehot.reshape(n_rows, hw)

    # --- Row tiling: prefer >=2 zero-padding row blocks (v7x megacore), else full extent.
    sub = max(_min_sublane(x2), _min_sublane(y2))
    cands = [c for c in (256, 128, 64, 32, 16, 8) if c % sub == 0]
    row_tile = next((c for c in cands if n_rows % c == 0 and n_rows // c >= 2), None)
    if row_tile is None:
        row_tile = n_rows if n_rows <= MAX_ROW_TILE else cands[0]
    row_blocks = _cdiv(n_rows, row_tile)

    # --- HW tiling: near-equal 128-aligned chunks, capped for pipeline depth & VMEM.
    bytes_per_col = 2 * row_tile * (x2.dtype.itemsize + y2.dtype.itemsize)  # 2x: dbl buf
    vmem_cols = max(LANE, (INPUT_VMEM_BUDGET // bytes_per_col) // LANE * LANE)
    max_hw_tile = min(HW_TILE_CAP, vmem_cols)

    hw_r = _round_up(hw, LANE)
    # With a single row block, split the HW axis into 2 independent halves so the
    # "parallel" grid axes still expose >=2 work units for v7x's two TensorCores.
    n_splits = 2 if (row_blocks == 1 and hw_r >= 2 * LANE) else 1
    nb_total = max(n_splits, _cdiv(hw_r, max_hw_tile))
    hw_tile = _round_up(_cdiv(hw_r, nb_total), LANE)
    nb_total = _cdiv(hw_r, hw_tile)
    nbps = _cdiv(nb_total, n_splits)

    n_acc = 3 if square else 2
    grid = (n_splits, row_blocks, nbps)

    def in_map(s, i, j):
        # Clamp so an odd split's trailing (fully out-of-range) block re-reads a valid
        # block; its contribution is masked to zero in the kernel.
        return (i, jnp.minimum(s * nbps + j, nb_total - 1))

    def out_map(s, i, j):
        return (s, i, 0)

    kernel = functools.partial(
        _soft_dice_kernel, hw=hw, hw_tile=hw_tile, hw_blocks_per_split=nbps,
        square=bool(square))

    cost = pl.CostEstimate(
        flops=(8 if square else 4) * n_rows * hw,
        transcendentals=0,
        bytes_accessed=(x2.size * x2.dtype.itemsize + y2.size * y2.dtype.itemsize
                        + n_acc * n_splits * n_rows * 4))

    outs = pl.pallas_call(
        kernel,
        out_shape=tuple(jax.ShapeDtypeStruct((n_splits, n_rows, 1), jnp.float32)
                        for _ in range(n_acc)),
        grid_spec=pltpu.PrefetchScalarGridSpec(
            num_scalar_prefetch=0,
            grid=grid,
            in_specs=[
                pl.BlockSpec((row_tile, hw_tile), in_map),
                pl.BlockSpec((row_tile, hw_tile), in_map),
            ],
            out_specs=tuple(pl.BlockSpec((None, row_tile, 1), out_map)
                            for _ in range(n_acc)),
        ),
        compiler_params=pltpu.CompilerParams(
            dimension_semantics=("parallel", "parallel", "arbitrary"),
            vmem_limit_bytes=32 * 1024 * 1024,
        ),
        cost_estimate=cost,
    )(x2, y2)

    # Combine HW-split partials and compute dice host-side (only B*C scalars per output).
    parts = [o.sum(axis=0).reshape(B, C) for o in outs]
    if batch_dice:
        parts = [p.sum(axis=0) for p in parts]          # (C,)
    if square:
        tp, fp, fn = parts
        num = 2.0 * tp + smooth
        den = 2.0 * tp + fp + fn + smooth
    else:
        xy, tot = parts
        num = 2.0 * xy + smooth
        den = tot + smooth
    dc = num / den
    if not do_bg:
        dc = dc[1:] if batch_dice else dc[:, 1:]
    return -jnp.mean(dc)


def _soft_dice_loss_ref(x, y_onehot, smooth=1.0, square=False, batch_dice=False, do_bg=True):
    x = x.astype(jnp.float32)
    y = y_onehot.astype(jnp.float32)
    axes = tuple([0] + list(range(2, x.ndim))) if batch_dice else tuple(range(2, x.ndim))
    tp = x * y
    fp = x * (1.0 - y)
    fn = (1.0 - x) * y
    if square:
        tp, fp, fn = tp * tp, fp * fp, fn * fn
    tp, fp, fn = (jnp.sum(t, axis=axes) for t in (tp, fp, fn))
    dc = (2.0 * tp + smooth) / (2.0 * tp + fp + fn + smooth)
    if not do_bg:
        dc = dc[1:] if batch_dice else dc[:, 1:]
    return -jnp.mean(dc)


if __name__ == "__main__":
    key = jax.random.PRNGKey(0)
    k_x, k_y = jax.random.split(key)

    B, C, H, W = 2, 4, 16, 16
    x = jax.random.uniform(k_x, (B, C, H, W), dtype=jnp.float32)
    y_labels = jax.random.randint(k_y, (B, H, W), 0, C)
    # Hard one-hot streamed as int8 (exact for 0/1 labels, 1 B/elem of HBM traffic).
    y_onehot_i8 = jnp.transpose(jax.nn.one_hot(y_labels, C, dtype=jnp.int8), (0, 3, 1, 2))
    y_onehot_f32 = y_onehot_i8.astype(jnp.float32)

    # Default config (batch_dice=False, do_bg=True, square=False), one-hot input.
    loss = soft_dice_loss(x, y_onehot_i8, smooth=1.0, square=False)
    jax.block_until_ready(loss)
    ref = _soft_dice_loss_ref(x, y_onehot_f32, smooth=1.0, square=False)
    assert jnp.allclose(loss, ref, atol=1e-5, rtol=1e-5), (loss, ref)

    # Label-map input path (wrapper builds the int8 one-hot, like scatter_ in the module).
    loss_lbl = soft_dice_loss(x, y_labels, smooth=1.0, square=False)
    jax.block_until_ready(loss_lbl)
    assert jnp.allclose(loss_lbl, ref, atol=1e-5, rtol=1e-5), (loss_lbl, ref)

    # square=True path (explicit tp^2/fp^2/fn^2 accumulators).
    loss_sq = soft_dice_loss(x, y_onehot_i8, smooth=1.0, square=True)
    jax.block_until_ready(loss_sq)
    ref_sq = _soft_dice_loss_ref(x, y_onehot_f32, smooth=1.0, square=True)
    assert jnp.allclose(loss_sq, ref_sq, atol=1e-5, rtol=1e-5), (loss_sq, ref_sq)

    # batch_dice=True, do_bg=False path (handled in the wrapper from per-row partials).
    loss_bd = soft_dice_loss(x, y_onehot_i8, smooth=1.0, square=False,
                             batch_dice=True, do_bg=False)
    jax.block_until_ready(loss_bd)
    ref_bd = _soft_dice_loss_ref(x, y_onehot_f32, smooth=1.0, square=False,
                                 batch_dice=True, do_bg=False)
    assert jnp.allclose(loss_bd, ref_bd, atol=1e-5, rtol=1e-5), (loss_bd, ref_bd)

    print("KERNEL_OK")
</pallas_src>

<mosaic_0001>
module attributes {stable_mosaic.version = 11 : i64} {
  func.func @_soft_dice_kernel(%arg0: i32, %arg1: i32, %arg2: i32, %arg3: memref<8x128xf32, #tpu.memory_space<vmem>>, %arg4: memref<8x128xi8, #tpu.memory_space<vmem>>, %arg5: memref<1x8x1xf32, #tpu.memory_space<vmem>>, %arg6: memref<1x8x1xf32, #tpu.memory_space<vmem>>) attributes {dimension_semantics = [#tpu.dimension_semantics<parallel>, #tpu.dimension_semantics<parallel>, #tpu.dimension_semantics<arbitrary>], iteration_bounds = array<i64: 2, 1, 1>, scalar_prefetch = 0 : i64, scratch_operands = 0 : i64, tpu.core_type = #tpu.core_type<tc>, window_params = [{transform_indices = @transform_0, window_bounds = array<i64: 8, 128>}, {transform_indices = @transform_1, window_bounds = array<i64: 8, 128>}, {transform_indices = @transform_2, window_bounds = array<i64: 1, 8, 1>}, {transform_indices = @transform_3, window_bounds = array<i64: 1, 8, 1>}]} {
    %c0_i32 = arith.constant 0 : i32
    %0 = arith.cmpi eq, %arg2, %c0_i32 : i32
    %1 = arith.extui %0 : i1 to i32
    %c0_i32_0 = arith.constant 0 : i32
    %2 = arith.cmpi ne, %1, %c0_i32_0 : i32
    scf.if %2 {
      %cst = arith.constant 0.000000e+00 : f32
      %16 = vector.broadcast %cst : f32 to vector<8x1xf32>
      %c0_7 = arith.constant 0 : index
      %c0_8 = arith.constant 0 : index
      %c0_9 = arith.constant 0 : index
      %17 = vector.load %arg5[%c0_7, %c0_8, %c0_9] : memref<1x8x1xf32, #tpu.memory_space<vmem>>, vector<1x8x1xf32>
      %18 = vector.shape_cast %17 : vector<1x8x1xf32> to vector<8x1xf32>
      %19 = vector.shape_cast %16 : vector<8x1xf32> to vector<1x8x1xf32>
      tpu.vector_store %arg5[%c0_7, %c0_8, %c0_9], %19 {strides = array<i32>} : memref<1x8x1xf32, #tpu.memory_space<vmem>>, vector<1x8x1xf32>,
      %cst_10 = arith.constant 0.000000e+00 : f32
      %20 = vector.broadcast %cst_10 : f32 to vector<8x1xf32>
      %c0_11 = arith.constant 0 : index
      %c0_12 = arith.constant 0 : index
      %c0_13 = arith.constant 0 : index
      %21 = vector.load %arg6[%c0_11, %c0_12, %c0_13] : memref<1x8x1xf32, #tpu.memory_space<vmem>>, vector<1x8x1xf32>
      %22 = vector.shape_cast %21 : vector<1x8x1xf32> to vector<8x1xf32>
      %23 = vector.shape_cast %20 : vector<8x1xf32> to vector<1x8x1xf32>
      tpu.vector_store %arg6[%c0_11, %c0_12, %c0_13], %23 {strides = array<i32>} : memref<1x8x1xf32, #tpu.memory_space<vmem>>, vector<1x8x1xf32>,
    } else {
    }
    %c0 = arith.constant 0 : index
    %c0_1 = arith.constant 0 : index
    %3 = vector.load %arg3[%c0, %c0_1] : memref<8x128xf32, #tpu.memory_space<vmem>>, vector<8x128xf32>
    %c0_2 = arith.constant 0 : index
    %c0_3 = arith.constant 0 : index
    %4 = vector.load %arg4[%c0_2, %c0_3] : memref<8x128xi8, #tpu.memory_space<vmem>>, vector<8x128xi8>
    %5 = arith.sitofp %4 : vector<8x128xi8> to vector<8x128xf32>
    %c1_i32 = arith.constant 1 : i32
    %6 = arith.muli %arg0, %c1_i32 : i32
    %7 = arith.addi %6, %arg2 : i32
    %c128_i32 = arith.constant 128 : i32
    %8 = arith.muli %7, %c128_i32 : i32
    %c128_i32_4 = arith.constant 128 : i32
    %9 = arith.addi %8, %c128_i32_4 : i32
    %c256_i32 = arith.constant 256 : i32
    %10 = arith.cmpi sle, %9, %c256_i32 : i32
    %11 = arith.extui %10 : i1 to i32
    %c0_i32_5 = arith.constant 0 : i32
    %12 = arith.cmpi ne, %11, %c0_i32_5 : i32
    scf.if %12 {
      %16 = arith.mulf %3, %5 : vector<8x128xf32>
      %c0_7 = arith.constant 0 : index
      %c0_8 = arith.constant 0 : index
      %c0_9 = arith.constant 0 : index
      %17 = vector.load %arg5[%c0_7, %c0_8, %c0_9] : memref<1x8x1xf32, #tpu.memory_space<vmem>>, vector<1x8x1xf32>
      %18 = vector.shape_cast %17 : vector<1x8x1xf32> to vector<8x1xf32>
      %cst = arith.constant dense<0.000000e+00> : vector<8xf32>
      %19 = vector.multi_reduction <add>, %16, %cst [1] : vector<8x128xf32> to vector<8xf32>
      %20 = vector.shape_cast %19 : vector<8xf32> to vector<8x1xf32>
      %21 = arith.addf %18, %20 : vector<8x1xf32>
      %c0_10 = arith.constant 0 : index
      %c0_11 = arith.constant 0 : index
      %c0_12 = arith.constant 0 : index
      %22 = vector.load %arg5[%c0_10, %c0_11, %c0_12] : memref<1x8x1xf32, #tpu.memory_space<vmem>>, vector<1x8x1xf32>
      %23 = vector.shape_cast %22 : vector<1x8x1xf32> to vector<8x1xf32>
      %24 = vector.shape_cast %21 : vector<8x1xf32> to vector<1x8x1xf32>
      tpu.vector_store %arg5[%c0_10, %c0_11, %c0_12], %24 {strides = array<i32>} : memref<1x8x1xf32, #tpu.memory_space<vmem>>, vector<1x8x1xf32>,
      %c0_13 = arith.constant 0 : index
      %c0_14 = arith.constant 0 : index
      %c0_15 = arith.constant 0 : index
      %25 = vector.load %arg6[%c0_13, %c0_14, %c0_15] : memref<1x8x1xf32, #tpu.memory_space<vmem>>, vector<1x8x1xf32>
      %26 = vector.shape_cast %25 : vector<1x8x1xf32> to vector<8x1xf32>
      %27 = arith.addf %3, %5 : vector<8x128xf32>
      %cst_16 = arith.constant dense<0.000000e+00> : vector<8xf32>
      %28 = vector.multi_reduction <add>, %27, %cst_16 [1] : vector<8x128xf32> to vector<8xf32>
      %29 = vector.shape_cast %28 : vector<8xf32> to vector<8x1xf32>
      %30 = arith.addf %26, %29 : vector<8x1xf32>
      %c0_17 = arith.constant 0 : index
      %c0_18 = arith.constant 0 : index
      %c0_19 = arith.constant 0 : index
      %31 = vector.load %arg6[%c0_17, %c0_18, %c0_19] : memref<1x8x1xf32, #tpu.memory_space<vmem>>, vector<1x8x1xf32>
      %32 = vector.shape_cast %31 : vector<1x8x1xf32> to vector<8x1xf32>
      %33 = vector.shape_cast %30 : vector<8x1xf32> to vector<1x8x1xf32>
      tpu.vector_store %arg6[%c0_17, %c0_18, %c0_19], %33 {strides = array<i32>} : memref<1x8x1xf32, #tpu.memory_space<vmem>>, vector<1x8x1xf32>,
    } else {
    }
    %true = arith.constant true
    %13 = arith.xori %10, %true : i1
    %14 = arith.extui %13 : i1 to i32
    %c0_i32_6 = arith.constant 0 : i32
    %15 = arith.cmpi ne, %14, %c0_i32_6 : i32
    scf.if %15 {
      %16 = tpu.iota {dimensions = array<i32: 1>} : vector<8x128xi32>
      %17 = vector.broadcast %8 : i32 to vector<8x128xi32>
      %18 = arith.addi %16, %17 : vector<8x128xi32>
      %c256_i32_7 = arith.constant 256 : i32
      %19 = vector.broadcast %c256_i32_7 : i32 to vector<8x128xi32>
      %20 = arith.cmpi slt, %18, %19 : vector<8x128xi32>
      %21 = arith.extui %20 : vector<8x128xi1> to vector<8x128xi32>
      %22 = arith.sitofp %21 : vector<8x128xi32> to vector<8x128xf32>
      %23 = arith.mulf %3, %22 : vector<8x128xf32>
      %24 = arith.mulf %5, %22 : vector<8x128xf32>
      %25 = arith.mulf %23, %24 : vector<8x128xf32>
      %c0_8 = arith.constant 0 : index
      %c0_9 = arith.constant 0 : index
      %c0_10 = arith.constant 0 : index
      %26 = vector.load %arg5[%c0_8, %c0_9, %c0_10] : memref<1x8x1xf32, #tpu.memory_space<vmem>>, vector<1x8x1xf32>
      %27 = vector.shape_cast %26 : vector<1x8x1xf32> to vector<8x1xf32>
      %cst = arith.constant dense<0.000000e+00> : vector<8xf32>
      %28 = vector.multi_reduction <add>, %25, %cst [1] : vector<8x128xf32> to vector<8xf32>
      %29 = vector.shape_cast %28 : vector<8xf32> to vector<8x1xf32>
      %30 = arith.addf %27, %29 : vector<8x1xf32>
      %c0_11 = arith.constant 0 : index
      %c0_12 = arith.constant 0 : index
      %c0_13 = arith.constant 0 : index
      %31 = vector.load %arg5[%c0_11, %c0_12, %c0_13] : memref<1x8x1xf32, #tpu.memory_space<vmem>>, vector<1x8x1xf32>
      %32 = vector.shape_cast %31 : vector<1x8x1xf32> to vector<8x1xf32>
      %33 = vector.shape_cast %30 : vector<8x1xf32> to vector<1x8x1xf32>
      tpu.vector_store %arg5[%c0_11, %c0_12, %c0_13], %33 {strides = array<i32>} : memref<1x8x1xf32, #tpu.memory_space<vmem>>, vector<1x8x1xf32>,
      %c0_14 = arith.constant 0 : index
      %c0_15 = arith.constant 0 : index
      %c0_16 = arith.constant 0 : index
      %34 = vector.load %arg6[%c0_14, %c0_15, %c0_16] : memref<1x8x1xf32, #tpu.memory_space<vmem>>, vector<1x8x1xf32>
      %35 = vector.shape_cast %34 : vector<1x8x1xf32> to vector<8x1xf32>
      %36 = arith.addf %23, %24 : vector<8x128xf32>
      %cst_17 = arith.constant dense<0.000000e+00> : vector<8xf32>
      %37 = vector.multi_reduction <add>, %36, %cst_17 [1] : vector<8x128xf32> to vector<8xf32>
      %38 = vector.shape_cast %37 : vector<8xf32> to vector<8x1xf32>
      %39 = arith.addf %35, %38 : vector<8x1xf32>
      %c0_18 = arith.constant 0 : index
      %c0_19 = arith.constant 0 : index
      %c0_20 = arith.constant 0 : index
      %40 = vector.load %arg6[%c0_18, %c0_19, %c0_20] : memref<1x8x1xf32, #tpu.memory_space<vmem>>, vector<1x8x1xf32>
      %41 = vector.shape_cast %40 : vector<1x8x1xf32> to vector<8x1xf32>
      %42 = vector.shape_cast %39 : vector<8x1xf32> to vector<1x8x1xf32>
      tpu.vector_store %arg6[%c0_18, %c0_19, %c0_20], %42 {strides = array<i32>} : memref<1x8x1xf32, #tpu.memory_space<vmem>>, vector<1x8x1xf32>,
    } else {
    }
    return
  }
  func.func @transform_0(%arg0: i32, %arg1: i32, %arg2: i32) -> (i32, i32) {
    %c1_i32 = arith.constant 1 : i32
    %0 = arith.muli %arg0, %c1_i32 : i32
    %1 = arith.addi %0, %arg2 : i32
    %c1_i32_0 = arith.constant 1 : i32
    %2 = arith.minsi %1, %c1_i32_0 : i32
    %c0_i32 = arith.constant 0 : i32
    return %arg1, %2 : i32, i32
  }
  func.func @transform_1(%arg0: i32, %arg1: i32, %arg2: i32) -> (i32, i32) {
    %c1_i32 = arith.constant 1 : i32
    %0 = arith.muli %arg0, %c1_i32 : i32
    %1 = arith.addi %0, %arg2 : i32
    %c1_i32_0 = arith.constant 1 : i32
    %2 = arith.minsi %1, %c1_i32_0 : i32
    %c0_i32 = arith.constant 0 : i32
    return %arg1, %2 : i32, i32
  }
  func.func @transform_2(%arg0: i32, %arg1: i32, %arg2: i32) -> (i32, i32, i32) {
    %c0_i32 = arith.constant 0 : i32
    %c0_i32_0 = arith.constant 0 : i32
    return %arg0, %arg1, %c0_i32 : i32, i32, i32
  }
  func.func @transform_3(%arg0: i32, %arg1: i32, %arg2: i32) -> (i32, i32, i32) {
    %c0_i32 = arith.constant 0 : i32
    %c0_i32_0 = arith.constant 0 : i32
    return %arg0, %arg1, %c0_i32 : i32, i32, i32
  }
}

</mosaic_0001>

<llo_original>
// kernel: tpu_custom_call.1
$region0: #{tpu_custom_call.1}
  #allocation0 [shape = 'u32[]', space=smem, size = 0x4, offset = 0x4, fixed_abs, tag = 'smem constant byte address 0x4 - core index']
  #allocation1 [shape = 'u32[144,128]{1,0:T(1,128)}', space=vmem, size = 0x12000, scoped, tag = 'internal scratch']
  %s0 = inlined_call_operand.hbm [shape: f32[8,256], index: 0, kind: input, shape index: {}]
  %s1 = inlined_call_operand.hbm [shape: s8[8,256], index: 1, kind: input, shape index: {}]
  %s2 = inlined_call_operand.vmem [shape: f32[2,8,1], index: 2, kind: output, shape index: {0}]
  %s3 = inlined_call_operand.vmem [shape: f32[2,8,1], index: 3, kind: output, shape index: {1}]
  %4 = xla_tuple %s2, %s3
  %s5 = sld [smem:[#allocation0]]
  $region69: #{tpu_custom_call.1} parent=0
    _
  %s7 = ssub.s32 1, %s5
  %s8 = scalar_select 0, %s7, %s5
  $region1: #{tpu_custom_call.1} parent=0
    #allocation2 [shape = 'u8[8192]{0}', space=vmem, size = 0x2000, scoped, tag = 'input window, operand 0']
    #allocation3 [shape = 's32[2]{0}', space=sflag, size = 0x8, scoped, tag = 'scoped memory for tpu_custom_call.1']
    #allocation4 [shape = 'u8[2048]{0}', space=vmem, size = 0x800, scoped, tag = 'input window, operand 1']
    #allocation5 [shape = 's32[2]{0}', space=sflag, size = 0x8, scoped, tag = 'scoped memory for tpu_custom_call.1']
    %9 = vsyncpa [#allocation3], 0
    %s10 = scalar_lea.sflag [#allocation3], 1
    %11 = vsyncpa %s10, 0
    %12 = vsyncpa [#allocation5], 0
    %s13 = scalar_lea.sflag [#allocation5], 1
    %14 = vsyncpa %s13, 0
    loop: start=0, step=1, limit=4
    $region2: #{tpu_custom_call.1} parent=1 // loop_pre_header
      _
    $region3: #{tpu_custom_call.1} parent=1 // loop_header
      %s16 = sphi 0, %s20
      %p17 = scmp.ge.s32.totalorder %s16, 4
      %s23 = sphi 0, %s42
      %s24 = sphi 0, %s38
      %s25 = sphi 0, %s34
      %s26 = sphi 0, %s23
      %s27 = sphi 0, %s24
      %s28 = sphi 0, %s25
      %s29 = sphi 0, %s26
      %s30 = sphi 0, %s27
      %s31 = sphi 0, %s28
      %s53 = sphi 0, %s55
      %s56 = sphi 0, %s53
      %s57 = sphi 0, %s56
      %s73 = sphi 0, %s57
      %s87 = sphi 0, %s89
      %s90 = sphi 0, %s87
      %s91 = sphi 0, %s90
      %s107 = sphi 0, %s91
      %s115 = sphi 0, %s117
      %s118 = sphi 0, %s115
      %s119 = sphi 0, %s118
      %s135 = sphi 0, %s119
      %s143 = sphi 0, %s145
      %s146 = sphi 0, %s143
      %s147 = sphi 0, %s146
      %s163 = sphi 0, %s147
    $region4: #{tpu_custom_call.1} parent=1 // loop_header_branch
      %19 = sbr.rel (%p17) target = $region8
    $region5: #{tpu_custom_call.1} parent=1 // loop_body
      %s21 = ssub.s32 %s16, 1
      %s22 = ssub.s32 %s16, 2
      %s32 = sadd.s32 1, %s25
      %p33 = scmp.ge.s32.totalorder %s32, 1
      %s34 = scalar_select %p33, 0, %s32
      %s35 = sadd.s32 1, %s24
      %s36 = scalar_select %p33, %s35, %s24
      %p37 = scmp.ge.s32.totalorder %s36, 1
      %s38 = scalar_select %p37, 0, %s36
      %s39 = sadd.s32 1, %s23
      %s40 = scalar_select %p37, %s39, %s23
      %p41 = scmp.ge.s32.totalorder %s40, 2
      %s42 = scalar_select %p41, 0, %s40
      %s43 = sadd.s32 %s23, %s25
      %p44 = scmp.lt.s32.totalorder %s43, 1
      %s45 = scalar_select %p44, %s43, 1
      %s46 = sadd.s32 %s42, %s34
      %p47 = scmp.lt.s32.totalorder %s46, 1
      %s48 = scalar_select %p47, %s46, 1
      %s49 = ssub.s32 %s24, %s38
      %s50 = ssub.s32 %s45, %s48
      %s51 = sor.u32 %s49, %s50
      %p52 = scmp.eq.s32.totalorder %s51, 0
      %s54 = sadd.s32 %s53, 1
      %s55 = scalar_select %p52, %s53, %s54
      %p58 = pneg %p52
      %p59 = scmp.eq.s32.totalorder %s16, 1
      %p60 = por %p58, %p59
      %p61 = scmp.ne.s32.totalorder %s53, %s56
      %p62 = scmp.eq.s32.totalorder %s16, 0
      %p63 = por %p61, %p62
      %p64 = scmp.ne.s32.totalorder %s53, %s56
      %p65 = scmp.eq.s32.totalorder %s21, 1
      %p66 = por %p64, %p65
      %p67 = scmp.ne.s32.totalorder %s56, %s57
      %p68 = scmp.eq.s32.totalorder %s21, 0
      %p69 = por %p67, %p68
      %p70 = scmp.ne.s32.totalorder %s56, %s57
      %p71 = scmp.eq.s32.totalorder %s22, 1
      %p72 = por %p70, %p71
      %p74 = scmp.ne.s32.totalorder %s57, %s73
      %p75 = scmp.eq.s32.totalorder %s22, 0
      %p76 = por %p74, %p75
      %s77 = sadd.s32 %s23, %s25
      %p78 = scmp.lt.s32.totalorder %s77, 1
      %s79 = scalar_select %p78, %s77, 1
      %s80 = sadd.s32 %s42, %s34
      %p81 = scmp.lt.s32.totalorder %s80, 1
      %s82 = scalar_select %p81, %s80, 1
      %s83 = ssub.s32 %s24, %s38
      %s84 = ssub.s32 %s79, %s82
      %s85 = sor.u32 %s83, %s84
      %p86 = scmp.eq.s32.totalorder %s85, 0
      %s88 = sadd.s32 %s87, 1
      %s89 = scalar_select %p86, %s87, %s88
      %p92 = pneg %p86
      %p93 = scmp.eq.s32.totalorder %s16, 1
      %p94 = por %p92, %p93
      %p95 = scmp.ne.s32.totalorder %s87, %s90
      %p96 = scmp.eq.s32.totalorder %s16, 0
      %p97 = por %p95, %p96
      %p98 = scmp.ne.s32.totalorder %s87, %s90
      %p99 = scmp.eq.s32.totalorder %s21, 1
      %p100 = por %p98, %p99
      %p101 = scmp.ne.s32.totalorder %s90, %s91
      %p102 = scmp.eq.s32.totalorder %s21, 0
      %p103 = por %p101, %p102
      %p104 = scmp.ne.s32.totalorder %s90, %s91
      %p105 = scmp.eq.s32.totalorder %s22, 1
      %p106 = por %p104, %p105
      %p108 = scmp.ne.s32.totalorder %s91, %s107
      %p109 = scmp.eq.s32.totalorder %s22, 0
      %p110 = por %p108, %p109
      %s111 = ssub.s32 %s23, %s42
      %s112 = ssub.s32 %s24, %s38
      %s113 = sor.u32 %s111, %s112
      %p114 = scmp.eq.s32.totalorder %s113, 0
      %s116 = sadd.s32 %s115, 1
      %s117 = scalar_select %p114, %s115, %s116
      %p120 = pneg %p114
      %p121 = scmp.eq.s32.totalorder %s16, 1
      %p122 = por %p120, %p121
      %p123 = scmp.ne.s32.totalorder %s115, %s118
      %p124 = scmp.eq.s32.totalorder %s16, 0
      %p125 = por %p123, %p124
      %p126 = scmp.ne.s32.totalorder %s115, %s118
      %p127 = scmp.eq.s32.totalorder %s21, 1
      %p128 = por %p126, %p127
      %p129 = scmp.ne.s32.totalorder %s118, %s119
      %p130 = scmp.eq.s32.totalorder %s21, 0
      %p131 = por %p129, %p130
      %p132 = scmp.ne.s32.totalorder %s118, %s119
      %p133 = scmp.eq.s32.totalorder %s22, 1
      %p134 = por %p132, %p133
      %p136 = scmp.ne.s32.totalorder %s119, %s135
      %p137 = scmp.eq.s32.totalorder %s22, 0
      %p138 = por %p136, %p137
      %s139 = ssub.s32 %s23, %s42
      %s140 = ssub.s32 %s24, %s38
      %s141 = sor.u32 %s139, %s140
      %p142 = scmp.eq.s32.totalorder %s141, 0
      %s144 = sadd.s32 %s143, 1
      %s145 = scalar_select %p142, %s143, %s144
      %p148 = pneg %p142
      %p149 = scmp.eq.s32.totalorder %s16, 1
      %p150 = por %p148, %p149
      %p151 = scmp.ne.s32.totalorder %s143, %s146
      %p152 = scmp.eq.s32.totalorder %s16, 0
      %p153 = por %p151, %p152
      %p154 = scmp.ne.s32.totalorder %s143, %s146
      %p155 = scmp.eq.s32.totalorder %s21, 1
      %p156 = por %p154, %p155
      %p157 = scmp.ne.s32.totalorder %s146, %s147
      %p158 = scmp.eq.s32.totalorder %s21, 0
      %p159 = por %p157, %p158
      %p160 = scmp.ne.s32.totalorder %s146, %s147
      %p161 = scmp.eq.s32.totalorder %s22, 1
      %p162 = por %p160, %p161
      %p164 = scmp.ne.s32.totalorder %s147, %s163
      %p165 = scmp.eq.s32.totalorder %s22, 0
      %p166 = por %p164, %p165
      %p167 = scmp.le.s32.totalorder 1, %s16
      %p168 = scmp.lt.s32.totalorder %s16, 3
      %p169 = pnand %p167, %p168
      %p170 = pneg %p169
      // Predicated region
      $region9: #{tpu_custom_call.1} parent=5 // pred_check
        _
      $region10: #{tpu_custom_call.1} parent=5 // pred_check_branch
        %172 = sbr.rel (%p169) target = $region12
      $region11: #{tpu_custom_call.1} parent=5 // pred_region
        %s173 = ssub.s32 %s16, 1
      $region12: #{tpu_custom_call.1} parent=5 // pred_fallthru
        _
      %p174 = scmp.lt.s32.totalorder %s16, 2
      // Predicated region
      $region13: #{tpu_custom_call.1} parent=5 // pred_check
        %p175 = pneg %p174
      $region14: #{tpu_custom_call.1} parent=5 // pred_check_branch
        %177 = sbr.rel (%p175) target = $region16
      $region15: #{tpu_custom_call.1} parent=5 // pred_region
        // Predicated region
        $region17: #{tpu_custom_call.1} parent=15 // pred_check
          %p178 = pneg %p63
        $region18: #{tpu_custom_call.1} parent=15 // pred_check_branch
          %180 = sbr.rel (%p178) target = $region20
        $region19: #{tpu_custom_call.1} parent=15 // pred_region
          %s181 = sand.u32 %s53, 1
          %s182 = scalar_lea.sflag [#allocation3], %s181
          %s183 = sand.u32 %s53, 1
          %s184 = smul.addr %s183, 8
          %s185 = scalar_lea.vmem [#allocation2], %s184
          %s186 = sadd.s32 %s23, %s25
          %p187 = scmp.lt.s32.totalorder %s186, 1
          %s188 = scalar_select %p187, %s186, 1
          %s190 = ssub.s32 128, 128
          %191 = vsyncadd %s182, %s190
          %s192 = smul.addr %s24, 2
          %s193 = sadd.s32 %s188, %s192
          %s194 = smul.addr %s193, 128
          %s195 = scalar_lea.hbm %s0, %s194
          %s197 = sshll.u32 %s185, 4
          %s198 = int_to_ptr.vmem [resolvable:$true] %s197
          %200 = dma.hbm_to_vmem [thread:$0]  %s195, 128, %s198, %s182
        $region20: #{tpu_custom_call.1} parent=15 // pred_fallthru
          _
        // Predicated region
        $region21: #{tpu_custom_call.1} parent=15 // pred_check
          %p201 = pneg %p97
        $region22: #{tpu_custom_call.1} parent=15 // pred_check_branch
          %203 = sbr.rel (%p201) target = $region24
        $region23: #{tpu_custom_call.1} parent=15 // pred_region
          %s204 = sand.u32 %s87, 1
          %s205 = scalar_lea.sflag [#allocation5], %s204
          %s206 = sand.u32 %s87, 1
          %s207 = smul.addr %s206, 2
          %s208 = scalar_lea.vmem [#allocation4], %s207
          %s209 = sadd.s32 %s23, %s25
          %p210 = scmp.lt.s32.totalorder %s209, 1
          %s211 = scalar_select %p210, %s209, 1
          %s213 = ssub.s32 32, 32
          %214 = vsyncadd %s205, %s213
          %s215 = smul.addr %s24, 2
          %s216 = sadd.s32 %s211, %s215
          %s217 = smul.addr %s216, 32
          %s218 = scalar_lea.hbm %s1, %s217
          %s220 = sshll.u32 %s208, 4
          %s221 = int_to_ptr.vmem [resolvable:$true] %s220
          %223 = dma.hbm_to_vmem [thread:$0]  %s218, 32, %s221, %s205
        $region24: #{tpu_custom_call.1} parent=15 // pred_fallthru
          _
      $region16: #{tpu_custom_call.1} parent=5 // pred_fallthru
        _
      %p224 = scmp.le.s32.totalorder 1, %s16
      %p225 = scmp.lt.s32.totalorder %s16, 3
      %p226 = pnand %p224, %p225
      %p227 = pneg %p226
      // Predicated region
      $region25: #{tpu_custom_call.1} parent=5 // pred_check
        _
      $region26: #{tpu_custom_call.1} parent=5 // pred_check_branch
        %229 = sbr.rel (%p226) target = $region28
      $region27: #{tpu_custom_call.1} parent=5 // pred_region
        %s230 = ssub.s32 %s16, 1
        %s231 = sand.u32 %s56, 1
        %s232 = scalar_lea.sflag [#allocation3], %s231
        %s233 = sand.u32 %s56, 1
        %s234 = smul.addr %s233, 8
        %s235 = scalar_lea.vmem [#allocation2], %s234
        // Predicated region
        $region29: #{tpu_custom_call.1} parent=27 // pred_check
          %p236 = pneg %p69
        $region30: #{tpu_custom_call.1} parent=27 // pred_check_branch
          %238 = sbr.rel (%p236) target = $region32
        $region31: #{tpu_custom_call.1} parent=27 // pred_region
          %239 = dma.done %s232, 128
        $region32: #{tpu_custom_call.1} parent=27 // pred_fallthru
          _
        %s240 = sand.u32 %s90, 1
        %s241 = scalar_lea.sflag [#allocation5], %s240
        %s242 = sand.u32 %s90, 1
        %s243 = smul.addr %s242, 2
        %s244 = scalar_lea.vmem [#allocation4], %s243
        // Predicated region
        $region33: #{tpu_custom_call.1} parent=27 // pred_check
          %p245 = pneg %p103
        $region34: #{tpu_custom_call.1} parent=27 // pred_check_branch
          %247 = sbr.rel (%p245) target = $region36
        $region35: #{tpu_custom_call.1} parent=27 // pred_region
          %248 = dma.done %s241, 32
        $region36: #{tpu_custom_call.1} parent=27 // pred_fallthru
          _
        %s249 = sand.u32 %s56, 1
        %s250 = scalar_lea.sflag [#allocation3], %s249
        %s251 = sand.u32 %s56, 1
        %s252 = smul.addr %s251, 8
        %s253 = scalar_lea.vmem [#allocation2], %s252
        %p254 = pneg %p69
        %p255 = pneg %p66
        %s256 = sand.u32 %s90, 1
        %s257 = scalar_lea.sflag [#allocation5], %s256
        %s258 = sand.u32 %s90, 1
        %s259 = smul.addr %s258, 2
        %s260 = scalar_lea.vmem [#allocation4], %s259
        %p261 = pneg %p103
        %p262 = pneg %p100
        %p263 = pneg %p131
        %p264 = pneg %p128
        %p265 = scmp.lt.s32.totalorder %s26, 1
        %s266 = scalar_select %p265, %s26, 1
        %p267 = scmp.lt.s32.totalorder %s27, 0
        %s268 = scalar_select %p267, %s27, 0
        %s269 = sadd.s32 %s268, %s266
        %s270 = smul.addr %s269, 8
        %s271 = scalar_lea.vmem %s2, %s270
        %p272 = pneg %p159
        %p273 = pneg %p156
        %p274 = scmp.lt.s32.totalorder %s26, 1
        %s275 = scalar_select %p274, %s26, 1
        %p276 = scmp.lt.s32.totalorder %s27, 0
        %s277 = scalar_select %p276, %s27, 0
        %s278 = sadd.s32 %s277, %s275
        %s279 = smul.addr %s278, 8
        %s280 = scalar_lea.vmem %s3, %s279
        %s281 = sadd.s32 %s26, %s28
        %p282 = scmp.lt.s32.totalorder %s281, 1
        %s283 = scalar_select %p282, %s281, 1
        %s284 = sadd.s32 %s26, %s28
        %p285 = scmp.lt.s32.totalorder %s284, 1
        %s286 = scalar_select %p285, %s284, 1
        %p287 = scmp.lt.s32.totalorder %s26, 1
        %s288 = scalar_select %p287, %s26, 1
        %p289 = scmp.lt.s32.totalorder %s27, 0
        %s290 = scalar_select %p289, %s27, 0
        %s291 = sadd.s32 %s290, %s288
        %s292 = smul.addr %s291, 8
        %s293 = scalar_lea.vmem %s2, %s292
        %p294 = scmp.lt.s32.totalorder %s26, 1
        %s295 = scalar_select %p294, %s26, 1
        %p296 = scmp.lt.s32.totalorder %s27, 0
        %s297 = scalar_select %p296, %s27, 0
        %s298 = sadd.s32 %s297, %s295
        %s299 = smul.addr %s298, 8
        %s300 = scalar_lea.vmem %s3, %s299
        %p301 = scmp.eq.s32.totalorder %s28, 0
        // Predicated region
        $region37: #{tpu_custom_call.1} parent=27 // pred_check
          %p302 = pneg %p301
        $region38: #{tpu_custom_call.1} parent=27 // pred_check_branch
          %304 = sbr.rel (%p302) target = $region40
        $region39: #{tpu_custom_call.1} parent=27 // pred_region
          %vm305 = vcmask 7168
          %306 = vst.msk [vmem:[%s293] sm:$0xff] %vm305, 0.0
          %307 = vst.msk [vmem:[%s300] sm:$0xff] %vm305, 0.0
        $region40: #{tpu_custom_call.1} parent=27 // pred_fallthru
          _
        %v308 = vld [vmem:[%s235] sm:$0xff]
        %v309 = vld [vmem:[%s244] sm:$0x3]
        %v310 = vunpack.c.0.s8 %v309
        %v311 = vcvt.s32.f32 %v310
        %s312 = sadd.s32 %s26, %s28
        %s313 = smul.u32 %s312, 128
        %s314 = sadd.s32 %s313, 128
        %p315 = scmp.le.s32.totalorder %s314, 256
        // Predicated region
        $region41: #{tpu_custom_call.1} parent=27 // pred_check
          %p316 = pneg %p315
        $region42: #{tpu_custom_call.1} parent=27 // pred_check_branch
          %318 = sbr.rel (%p316) target = $region44
        $region43: #{tpu_custom_call.1} parent=27 // pred_region
          %v319 = vmul.f32 %v308, %v311
          %v320 = vld [vmem:[%s293] sm:$0xff]
          %321 = vadd.xlane.f32.xlu0 %v319
          %v322 = vpop.xlane.xlu0 %321
          %v323 = vadd.f32 %v320, %v322
          %vm324 = vcmask 7168
          %325 = vst.msk [vmem:[%s293] sm:$0xff] %vm324, %v323
          %v326 = vld [vmem:[%s300] sm:$0xff]
          %v327 = vadd.f32 %v308, %v311
          %328 = vadd.xlane.f32.xlu0 %v327
          %v329 = vpop.xlane.xlu0 %328
          %v330 = vadd.f32 %v326, %v329
          %331 = vst.msk [vmem:[%s300] sm:$0xff] %vm324, %v330
        $region44: #{tpu_custom_call.1} parent=27 // pred_fallthru
          _
        %p332 = scmp.gt.s32.totalorder %s314, 256
        // Predicated region
        $region45: #{tpu_custom_call.1} parent=27 // pred_check
          %p333 = pneg %p332
        $region46: #{tpu_custom_call.1} parent=27 // pred_check_branch
          %335 = sbr.rel (%p333) target = $region48
        $region47: #{tpu_custom_call.1} parent=27 // pred_region
          %v336 = vlaneseq
          %v337 = vand.u32 %v336, 127
          %v338 = vstv %s313
          %v339 = vadd.s32 %v337, %v338
          %vm340 = vcmp.lt.s32.totalorder %v339, 256
          %v341 = vsel %vm340, 1, 0
          %v342 = vcvt.s32.f32 %v341
          %v343 = vmul.f32 %v308, %v342
          %v344 = vmul.f32 %v311, %v342
          %v345 = vmul.f32 %v343, %v344
          %v346 = vld [vmem:[%s293] sm:$0xff]
          %347 = vadd.xlane.f32.xlu0 %v345
          %v348 = vpop.xlane.xlu0 %347
          %v349 = vadd.f32 %v346, %v348
          %vm350 = vcmask 7168
          %351 = vst.msk [vmem:[%s293] sm:$0xff] %vm350, %v349
          %v352 = vld [vmem:[%s300] sm:$0xff]
          %v353 = vadd.f32 %v343, %v344
          %354 = vadd.xlane.f32.xlu0 %v353
          %v355 = vpop.xlane.xlu0 %354
          %v356 = vadd.f32 %v352, %v355
          %357 = vst.msk [vmem:[%s300] sm:$0xff] %vm350, %v356
        $region48: #{tpu_custom_call.1} parent=27 // pred_fallthru
          _
        %p358 = scmp.lt.s32.totalorder %s26, 1
        %s359 = scalar_select %p358, %s26, 1
        %p360 = scmp.lt.s32.totalorder %s27, 0
        %s361 = scalar_select %p360, %s27, 0
        %s362 = sadd.s32 %s361, %s359
        %s363 = smul.addr %s362, 8
        %s364 = scalar_lea.vmem %s2, %s363
        %p365 = scmp.lt.s32.totalorder %s26, 1
        %s366 = scalar_select %p365, %s26, 1
        %p367 = scmp.lt.s32.totalorder %s27, 0
        %s368 = scalar_select %p367, %s27, 0
        %s369 = sadd.s32 %s368, %s366
        %s370 = smul.addr %s369, 8
        %s371 = scalar_lea.vmem %s3, %s370
        // Predicated region
        $region49: #{tpu_custom_call.1} parent=27 // pred_check
          %p372 = pneg %p128
        $region50: #{tpu_custom_call.1} parent=27 // pred_check_branch
          %374 = sbr.rel (%p372) target = $region52
        $region51: #{tpu_custom_call.1} parent=27 // pred_region
          _
        $region52: #{tpu_custom_call.1} parent=27 // pred_fallthru
          _
        // Predicated region
        $region53: #{tpu_custom_call.1} parent=27 // pred_check
          %p375 = pneg %p156
        $region54: #{tpu_custom_call.1} parent=27 // pred_check_branch
          %377 = sbr.rel (%p375) target = $region56
        $region55: #{tpu_custom_call.1} parent=27 // pred_region
          _
        $region56: #{tpu_custom_call.1} parent=27 // pred_fallthru
          _
      $region28: #{tpu_custom_call.1} parent=5 // pred_fallthru
        _
      %p378 = scmp.le.s32.totalorder 2, %s16
      // Predicated region
      $region57: #{tpu_custom_call.1} parent=5 // pred_check
        %p379 = pneg %p378
      $region58: #{tpu_custom_call.1} parent=5 // pred_check_branch
        %381 = sbr.rel (%p379) target = $region60
      $region59: #{tpu_custom_call.1} parent=5 // pred_region
        %s382 = ssub.s32 %s16, 2
        // Predicated region
        $region61: #{tpu_custom_call.1} parent=59 // pred_check
          %p383 = pneg %p134
        $region62: #{tpu_custom_call.1} parent=59 // pred_check_branch
          %385 = sbr.rel (%p383) target = $region64
        $region63: #{tpu_custom_call.1} parent=59 // pred_region
          %p386 = scmp.lt.s32.totalorder %s29, 1
          %s387 = scalar_select %p386, %s29, 1
          %p388 = scmp.lt.s32.totalorder %s30, 0
          %s389 = scalar_select %p388, %s30, 0
          %s390 = sadd.s32 %s389, %s387
          %s391 = smul.addr %s390, 8
          %s392 = scalar_lea.vmem %s2, %s391
        $region64: #{tpu_custom_call.1} parent=59 // pred_fallthru
          _
        // Predicated region
        $region65: #{tpu_custom_call.1} parent=59 // pred_check
          %p393 = pneg %p162
        $region66: #{tpu_custom_call.1} parent=59 // pred_check_branch
          %395 = sbr.rel (%p393) target = $region68
        $region67: #{tpu_custom_call.1} parent=59 // pred_region
          %p396 = scmp.lt.s32.totalorder %s29, 1
          %s397 = scalar_select %p396, %s29, 1
          %p398 = scmp.lt.s32.totalorder %s30, 0
          %s399 = scalar_select %p398, %s30, 0
          %s400 = sadd.s32 %s399, %s397
          %s401 = smul.addr %s400, 8
          %s402 = scalar_lea.vmem %s3, %s401
        $region68: #{tpu_custom_call.1} parent=59 // pred_fallthru
          _
      $region60: #{tpu_custom_call.1} parent=5 // pred_fallthru
        _
    $region6: #{tpu_custom_call.1} parent=1 // loop_footer
      %s20 = sadd.s32 1, %s16
    $region7: #{tpu_custom_call.1} parent=1 // loop_footer_branch
      %15 = sbr.rel target = $region3
    $region8: #{tpu_custom_call.1} parent=1 // loop_exit
      _
    %403 = vsyncpa [#allocation3], 1
    %s404 = scalar_lea.sflag [#allocation3], 1
    %405 = vsyncpa %s404, 1
    %406 = vsyncpa [#allocation5], 1
    %s407 = scalar_lea.sflag [#allocation5], 1
    %408 = vsyncpa %s407, 1

</llo_original>
